<compile_context>
chip_gen: v5e
topology: v5e:2x2
jax: 0.10.0
libtpu: 0.0.40
codegen_flags: <defaults>
</compile_context>

<pallas_src>
import jax
import jax.numpy as jnp
from jax.experimental import pallas as pl
from jax.experimental.pallas import tpu as pltpu

EPS = 1e-6


def _sublayer_connection_kernel(x_ref, w_ref, b_ref, g_ref, beta_ref, o_ref):
    tn = o_ref.shape[-1]
    x = x_ref[...].astype(jnp.float32)            # (TR, D) full feature row
    d = x.shape[-1]

    # LayerNorm (unbiased std, eps added to std -> matches the torch module)
    mean = jnp.mean(x, axis=-1, keepdims=True)
    xc = x - mean
    var = jnp.sum(xc * xc, axis=-1, keepdims=True) / jnp.float32(d - 1)
    std = jnp.sqrt(var)
    inv = pl.reciprocal(std + EPS, approx=True)   # EUP slot instead of VALU divide
    normed = (xc * inv) * g_ref[...] + beta_ref[...]

    # sublayer: Linear(size, size) on the MXU — bf16 operands, f32 accumulate
    y = jnp.dot(normed.astype(jnp.bfloat16), w_ref[...],
                preferred_element_type=jnp.float32)
    y = y + b_ref[...].astype(jnp.float32)

    # dropout (eval mode) -> identity; residual add against the matching
    # column slice of x for this output-column tile.
    if tn == d:                                   # static (trace-time) branch
        xres = x
    else:
        col0 = pl.multiple_of(pl.program_id(1) * tn, tn)
        xres = x_ref[:, pl.ds(col0, tn)].astype(jnp.float32)
    o_ref[...] = (xres + y).astype(o_ref.dtype)


def sublayer_connection(x, w, b, gamma, beta, *, tile_rows=256, tile_cols=256):
    """x: (rows, D); w: (D, D); b/gamma/beta: (D,)."""
    rows, d = x.shape
    assert d > 1, "hidden size must be > 1 (unbiased std uses d - 1)"
    tr = min(tile_rows, rows)
    tn = min(tile_cols, d)
    assert rows % tr == 0 and (tr % 8 == 0 or tr == rows)
    assert d % tn == 0 and (tn % 128 == 0 or tn == d)

    w_bf16 = w.astype(jnp.bfloat16)               # halve resident-W traffic
    b2 = b.reshape(1, d)
    g2 = gamma.reshape(1, d)
    beta2 = beta.reshape(1, d)

    grid = (rows // tr, d // tn)

    # VMEM budget: double-buffered x / W / out tiles + small param rows.
    itemsize = x.dtype.itemsize
    vmem_need = (2 * tr * d * itemsize            # x tiles
                 + 2 * d * tn * 2                 # W tiles (bf16)
                 + 2 * tr * tn * itemsize         # out tiles
                 + 2 * 3 * d * 4)                 # bias / gamma / beta rows
    vmem_limit = int(min(max(32 * 1024 * 1024, 2 * vmem_need),
                         64 * 1024 * 1024))       # stay inside v7x physical VMEM

    cost = pl.CostEstimate(
        flops=2 * rows * d * d,
        transcendentals=2 * rows * (d // tn),
        bytes_accessed=2 * rows * d * itemsize + d * d * 2 + 3 * d * 4,
    )

    return pl.pallas_call(
        _sublayer_connection_kernel,
        out_shape=jax.ShapeDtypeStruct((rows, d), x.dtype),
        grid_spec=pltpu.PrefetchScalarGridSpec(
            num_scalar_prefetch=0,
            grid=grid,
            in_specs=[
                pl.BlockSpec((tr, d), lambda i, j: (i, 0)),   # x: full row, resident across j
                pl.BlockSpec((d, tn), lambda i, j: (0, j)),   # W column tile (bf16)
                pl.BlockSpec((1, tn), lambda i, j: (0, j)),   # bias column tile
                pl.BlockSpec((1, d), lambda i, j: (0, 0)),    # gamma (a_2)
                pl.BlockSpec((1, d), lambda i, j: (0, 0)),    # beta  (b_2)
            ],
            out_specs=pl.BlockSpec((tr, tn), lambda i, j: (i, j)),
        ),
        compiler_params=pltpu.CompilerParams(
            dimension_semantics=("parallel", "parallel"),
            vmem_limit_bytes=vmem_limit,
        ),
        cost_estimate=cost,
    )(x, w_bf16, b2, g2, beta2)


def reference(x, w, b, gamma, beta):
    xf = x.astype(jnp.float32)
    mean = jnp.mean(xf, axis=-1, keepdims=True)
    xc = xf - mean
    var = jnp.sum(xc * xc, axis=-1, keepdims=True) / (xf.shape[-1] - 1)
    std = jnp.sqrt(var)
    normed = gamma * xc / (std + EPS) + beta
    y = normed @ w + b
    return (xf + y).astype(x.dtype)


if __name__ == "__main__":
    key = jax.random.PRNGKey(0)
    batch, seq, size = 2, 8, 32
    dropout_ratio = 0.1  # eval mode -> identity; kept for parity with __init__

    kx, kw, kb = jax.random.split(key, 3)
    x = jax.random.normal(kx, (batch, seq, size), dtype=jnp.float32)

    # Deterministic synthetic parameters
    gamma = jnp.ones((size,), jnp.float32)   # a_2 init
    beta = jnp.zeros((size,), jnp.float32)   # b_2 init
    w = jax.random.normal(kw, (size, size), dtype=jnp.float32) * 0.02
    b = jax.random.normal(kb, (size,), dtype=jnp.float32) * 0.01

    x2d = x.reshape(batch * seq, size)       # layout: [rows, hidden]
    out2d = sublayer_connection(x2d, w, b, gamma, beta)
    out = out2d.reshape(batch, seq, size)
    jax.block_until_ready(out)

    ref = reference(x2d, w, b, gamma, beta).reshape(batch, seq, size)
    # bf16 MXU operands + approx reciprocal => slightly looser tolerance than f32
    assert jnp.allclose(out, ref, atol=1e-2, rtol=1e-2), "mismatch vs reference"

    print("KERNEL_OK")
</pallas_src>

<mosaic_0001>
module attributes {stable_mosaic.version = 11 : i64} {
  func.func @_sublayer_connection_kernel(%arg0: i32, %arg1: i32, %arg2: memref<16x32xf32, #tpu.memory_space<vmem>>, %arg3: memref<32x32xbf16, #tpu.memory_space<vmem>>, %arg4: memref<1x32xf32, #tpu.memory_space<vmem>>, %arg5: memref<1x32xf32, #tpu.memory_space<vmem>>, %arg6: memref<1x32xf32, #tpu.memory_space<vmem>>, %arg7: memref<16x32xf32, #tpu.memory_space<vmem>>) attributes {dimension_semantics = [#tpu.dimension_semantics<parallel>, #tpu.dimension_semantics<parallel>], iteration_bounds = array<i64: 1, 1>, scalar_prefetch = 0 : i64, scratch_operands = 0 : i64, tpu.core_type = #tpu.core_type<tc>, window_params = [{transform_indices = @transform_0, window_bounds = array<i64: 16, 32>}, {transform_indices = @transform_1, window_bounds = array<i64: 32, 32>}, {transform_indices = @transform_2, window_bounds = array<i64: 1, 32>}, {pipeline_mode = #tpu.pipeline_mode<synchronous>, transform_indices = @transform_3, window_bounds = array<i64: 1, 32>}, {pipeline_mode = #tpu.pipeline_mode<synchronous>, transform_indices = @transform_4, window_bounds = array<i64: 1, 32>}, {transform_indices = @transform_5, window_bounds = array<i64: 16, 32>}]} {
    %c0 = arith.constant 0 : index
    %c0_0 = arith.constant 0 : index
    %0 = vector.load %arg2[%c0, %c0_0] : memref<16x32xf32, #tpu.memory_space<vmem>>, vector<16x32xf32>
    %cst = arith.constant dense<0.000000e+00> : vector<16xf32>
    %1 = vector.multi_reduction <add>, %0, %cst [1] : vector<16x32xf32> to vector<16xf32>
    %2 = vector.shape_cast %1 : vector<16xf32> to vector<16x1xf32>
    %cst_1 = arith.constant 3.200000e+01 : f32
    %3 = vector.broadcast %cst_1 : f32 to vector<16x1xf32>
    %4 = arith.divf %2, %3 : vector<16x1xf32>
    %5 = vector.broadcast %4 : vector<16x1xf32> to vector<16x32xf32>
    %6 = arith.subf %0, %5 : vector<16x32xf32>
    %7 = arith.mulf %6, %6 : vector<16x32xf32>
    %cst_2 = arith.constant dense<0.000000e+00> : vector<16xf32>
    %8 = vector.multi_reduction <add>, %7, %cst_2 [1] : vector<16x32xf32> to vector<16xf32>
    %9 = vector.shape_cast %8 : vector<16xf32> to vector<16x1xf32>
    %cst_3 = arith.constant 3.100000e+01 : f32
    %10 = vector.broadcast %cst_3 : f32 to vector<16x1xf32>
    %11 = arith.divf %9, %10 : vector<16x1xf32>
    %12 = math.sqrt %11 : vector<16x1xf32>
    %cst_4 = arith.constant 9.99999997E-7 : f32
    %13 = vector.broadcast %cst_4 : f32 to vector<16x1xf32>
    %14 = arith.addf %12, %13 : vector<16x1xf32>
    %15 = tpu.reciprocal %14 {approx = true} : vector<16x1xf32> -> vector<16x1xf32>
    %16 = vector.broadcast %15 : vector<16x1xf32> to vector<16x32xf32>
    %17 = arith.mulf %6, %16 : vector<16x32xf32>
    %c0_5 = arith.constant 0 : index
    %c0_6 = arith.constant 0 : index
    %18 = vector.load %arg5[%c0_5, %c0_6] : memref<1x32xf32, #tpu.memory_space<vmem>>, vector<1x32xf32>
    %19 = vector.broadcast %18 : vector<1x32xf32> to vector<16x32xf32>
    %20 = arith.mulf %17, %19 : vector<16x32xf32>
    %c0_7 = arith.constant 0 : index
    %c0_8 = arith.constant 0 : index
    %21 = vector.load %arg6[%c0_7, %c0_8] : memref<1x32xf32, #tpu.memory_space<vmem>>, vector<1x32xf32>
    %22 = vector.broadcast %21 : vector<1x32xf32> to vector<16x32xf32>
    %23 = arith.addf %20, %22 : vector<16x32xf32>
    %24 = arith.truncf %23 : vector<16x32xf32> to vector<16x32xbf16>
    %c0_9 = arith.constant 0 : index
    %c0_10 = arith.constant 0 : index
    %25 = vector.load %arg3[%c0_9, %c0_10] : memref<32x32xbf16, #tpu.memory_space<vmem>>, vector<32x32xbf16>
    %cst_11 = arith.constant dense<0.000000e+00> : vector<16x32xf32>
    %26 = tpu.matmul %24, %25, %cst_11 {dimension_numbers = #tpu.dot_dimension_numbers<[1], [0], [0], [1], [0, 0, 1, 1], [], []>} : vector<16x32xbf16>, vector<32x32xbf16>, vector<16x32xf32> -> vector<16x32xf32>
    %c0_12 = arith.constant 0 : index
    %c0_13 = arith.constant 0 : index
    %27 = vector.load %arg4[%c0_12, %c0_13] : memref<1x32xf32, #tpu.memory_space<vmem>>, vector<1x32xf32>
    %28 = vector.broadcast %27 : vector<1x32xf32> to vector<16x32xf32>
    %29 = arith.addf %26, %28 : vector<16x32xf32>
    %30 = arith.addf %0, %29 : vector<16x32xf32>
    %c0_14 = arith.constant 0 : index
    %c0_15 = arith.constant 0 : index
    %31 = vector.load %arg7[%c0_14, %c0_15] : memref<16x32xf32, #tpu.memory_space<vmem>>, vector<16x32xf32>
    tpu.vector_store %arg7[%c0_14, %c0_15], %30 {strides = array<i32>} : memref<16x32xf32, #tpu.memory_space<vmem>>, vector<16x32xf32>,
    return
  }
  func.func @transform_0(%arg0: i32, %arg1: i32) -> (i32, i32) {
    %c0_i32 = arith.constant 0 : i32
    %c0_i32_0 = arith.constant 0 : i32
    return %arg0, %c0_i32 : i32, i32
  }
  func.func @transform_1(%arg0: i32, %arg1: i32) -> (i32, i32) {
    %c0_i32 = arith.constant 0 : i32
    %c0_i32_0 = arith.constant 0 : i32
    return %c0_i32, %arg1 : i32, i32
  }
  func.func @transform_2(%arg0: i32, %arg1: i32) -> (i32, i32) {
    %c0_i32 = arith.constant 0 : i32
    %c0_i32_0 = arith.constant 0 : i32
    return %c0_i32, %arg1 : i32, i32
  }
  func.func @transform_3(%arg0: i32, %arg1: i32) -> (i32, i32) {
    %c0_i32 = arith.constant 0 : i32
    %c0_i32_0 = arith.constant 0 : i32
    %c0_i32_1 = arith.constant 0 : i32
    return %c0_i32, %c0_i32_0 : i32, i32
  }
  func.func @transform_4(%arg0: i32, %arg1: i32) -> (i32, i32) {
    %c0_i32 = arith.constant 0 : i32
    %c0_i32_0 = arith.constant 0 : i32
    %c0_i32_1 = arith.constant 0 : i32
    return %c0_i32, %c0_i32_0 : i32, i32
  }
  func.func @transform_5(%arg0: i32, %arg1: i32) -> (i32, i32) {
    %c0_i32 = arith.constant 0 : i32
    return %arg0, %arg1 : i32, i32
  }
}

</mosaic_0001>

<llo_original>
// kernel: tpu_custom_call.1
$region0: #{tpu_custom_call.1}
  #allocation0 [shape = 'u32[]', space=smem, size = 0x4, offset = 0x4, fixed_abs, tag = 'smem constant byte address 0x4 - core index']
  #allocation1 [shape = 'u32[72,128]{1,0:T(1,128)}', space=vmem, size = 0x9000, scoped, tag = 'internal scratch']
  %s0 = inlined_call_operand.hbm [shape: f32[16,32], index: 0, kind: input, shape index: {}]
  %s1 = inlined_call_operand.hbm [shape: bf16[32,32], index: 1, kind: input, shape index: {}]
  %s2 = inlined_call_operand.vmem [shape: f32[1,32], index: 2, kind: input, shape index: {}]
  %s3 = inlined_call_operand.vmem [shape: f32[1,32], index: 3, kind: input, shape index: {}]
  %s4 = inlined_call_operand.vmem [shape: f32[1,32], index: 4, kind: input, shape index: {}]
  %s5 = inlined_call_operand.hbm [shape: f32[16,32], index: 5, kind: output, shape index: {}]
  %s6 = sld [smem:[#allocation0]]
  $region38: #{tpu_custom_call.1} parent=0
    _
  %s8 = ssub.s32 1, %s6
  %s9 = scalar_select 0, %s8, %s6
  $region1: #{tpu_custom_call.1} parent=0
    #allocation2 [shape = 'u8[8192]{0}', space=vmem, size = 0x2000, scoped, tag = 'input window, operand 0, single buffered']
    #allocation3 [shape = 's32[1]{0}', space=sflag, size = 0x4, scoped, tag = 'scoped memory for tpu_custom_call.1']
    #allocation4 [shape = 's32[1]{0}', space=sflag, size = 0x4, scoped, tag = 'scoped memory for tpu_custom_call.1']
    #allocation5 [shape = 'u8[8192]{0}', space=vmem, size = 0x2000, scoped, tag = 'input window, operand 1, single buffered']
    #allocation6 [shape = 's32[1]{0}', space=sflag, size = 0x4, scoped, tag = 'scoped memory for tpu_custom_call.1']
    #allocation7 [shape = 'u8[8192]{0}', space=vmem, size = 0x2000, scoped, tag = 'output window, operand 0, single buffered']
    %10 = vsyncpa [#allocation3], 0
    %11 = vsyncpa [#allocation6], 0
    %12 = vsyncpa [#allocation4], 0
    // Predicated region
    $region2: #{tpu_custom_call.1} parent=1 // pred_check
      _
    $region3: #{tpu_custom_call.1} parent=1 // pred_check_branch
      %14 = sbr.rel (0) target = $region5
    $region4: #{tpu_custom_call.1} parent=1 // pred_region
      %16 = vsyncadd [#allocation3], 0
      %s17 = sshll.u32 %s0, 4
      %s18 = int_to_ptr.hbm [resolvable:$true] %s17
      %s19 = sshll.u32 [#allocation2], 4
      %s20 = int_to_ptr.vmem [resolvable:$true] %s19
      %25 = dma.hbm_to_vmem [thread:$0]  %s18, 256, %s20, [#allocation3], 128, 128, 8
    $region5: #{tpu_custom_call.1} parent=1 // pred_fallthru
      _
    // Predicated region
    $region6: #{tpu_custom_call.1} parent=1 // pred_check
      _
    $region7: #{tpu_custom_call.1} parent=1 // pred_check_branch
      %27 = sbr.rel (0) target = $region9
    $region8: #{tpu_custom_call.1} parent=1 // pred_region
      %29 = vsyncadd [#allocation6], 0
      %s30 = sshll.u32 %s1, 4
      %s31 = int_to_ptr.hbm [resolvable:$true] %s30
      %s32 = sshll.u32 [#allocation5], 4
      %s33 = int_to_ptr.vmem [resolvable:$true] %s32
      %38 = dma.hbm_to_vmem [thread:$0]  %s31, 256, %s33, [#allocation6], 64, 64, 4
    $region9: #{tpu_custom_call.1} parent=1 // pred_fallthru
      _
    // Predicated region
    $region10: #{tpu_custom_call.1} parent=1 // pred_check
      _
    $region11: #{tpu_custom_call.1} parent=1 // pred_check_branch
      %40 = sbr.rel (0) target = $region13
    $region12: #{tpu_custom_call.1} parent=1 // pred_region
      _
    $region13: #{tpu_custom_call.1} parent=1 // pred_fallthru
      _
    // Predicated region
    $region14: #{tpu_custom_call.1} parent=1 // pred_check
      _
    $region15: #{tpu_custom_call.1} parent=1 // pred_check_branch
      %42 = sbr.rel (0) target = $region17
    $region16: #{tpu_custom_call.1} parent=1 // pred_region
      _
    $region17: #{tpu_custom_call.1} parent=1 // pred_fallthru
      _
    // Predicated region
    $region18: #{tpu_custom_call.1} parent=1 // pred_check
      _
    $region19: #{tpu_custom_call.1} parent=1 // pred_check_branch
      %44 = sbr.rel (0) target = $region21
    $region20: #{tpu_custom_call.1} parent=1 // pred_region
      _
    $region21: #{tpu_custom_call.1} parent=1 // pred_fallthru
      _
    // Predicated region
    $region22: #{tpu_custom_call.1} parent=1 // pred_check
      _
    $region23: #{tpu_custom_call.1} parent=1 // pred_check_branch
      %46 = sbr.rel (0) target = $region25
    $region24: #{tpu_custom_call.1} parent=1 // pred_region
      %48 = dma.done [#allocation3], 256
    $region25: #{tpu_custom_call.1} parent=1 // pred_fallthru
      _
    // Predicated region
    $region26: #{tpu_custom_call.1} parent=1 // pred_check
      _
    $region27: #{tpu_custom_call.1} parent=1 // pred_check_branch
      %50 = sbr.rel (0) target = $region29
    $region28: #{tpu_custom_call.1} parent=1 // pred_region
      %52 = dma.done [#allocation6], 256
    $region29: #{tpu_custom_call.1} parent=1 // pred_fallthru
      _
    %v54 = vld [vmem:[#allocation2] sm:$0xff]
    %v55 = vld [vmem:[#allocation2 + $0x8] sm:$0xff]
    %vm56 = vcmask 261120
    %v57 = vsel %vm56, %v54, 0.0
    %58 = vadd.xlane.f32.xlu0 %v57
    %v59 = vpop.xlane.xlu0 %58
    %v60 = vsel %vm56, %v55, 0.0
    %61 = vadd.xlane.f32.xlu0 %v60
    %v62 = vpop.xlane.xlu0 %61
    %v63 = vrcp.pop 32.0
    %v64 = vmul.f32 32.0, %v63
    %v65 = vsub.f32 1.0, %v64
    %v66 = vmul.f32 %v63, %v65
    %v67 = vadd.f32 %v63, %v66
    %vm68 = vweird.f32 %v63
    %v69 = vsel %vm68, %v63, %v67
    %v70 = vmul.f32 %v59, %v69
    %v71 = vmul.f32 %v62, %v69
    %v72 = vsub.f32 %v54, %v70
    %v73 = vsub.f32 %v55, %v71
    %v74 = vmul.f32 %v72, %v72
    %v75 = vmul.f32 %v73, %v73
    %v76 = vsel %vm56, %v74, 0.0
    %77 = vadd.xlane.f32.xlu0 %v76
    %v78 = vpop.xlane.xlu0 %77
    %v79 = vsel %vm56, %v75, 0.0
    %80 = vadd.xlane.f32.xlu0 %v79
    %v81 = vpop.xlane.xlu0 %80
    %v82 = vrcp.pop 31.0
    %v83 = vmul.f32 31.0, %v82
    %v84 = vsub.f32 1.0, %v83
    %v85 = vmul.f32 %v82, %v84
    %v86 = vadd.f32 %v82, %v85
    %vm87 = vweird.f32 %v82
    %v88 = vsel %vm87, %v82, %v86
    %v89 = vmul.f32 %v78, %v88
    %v90 = vmul.f32 %v81, %v88
    %v91 = vrsqrt.pop %v89
    %v92 = vmul.f32 %v91, %v89
    %v93 = vmul.f32 %v92, %v91
    %v94 = vmul.f32 0.5, %v93
    %v95 = vsub.f32 1.5, %v94
    %v96 = vmul.f32 %v91, %v95
    %v97 = vmul.f32 %v89, %v96
    %vm98 = vcmp.eq.f32.partialorder %v89, inf
    %v99 = vsel %vm98, %v89, %v97
    %vm100 = vcmp.eq.f32.partialorder %v89, 0.0
    %v101 = vand.u32 %v89, 2147483648
    %v102 = vsel %vm100, %v101, %v99
    %v103 = vrsqrt.pop %v90
    %v104 = vmul.f32 %v103, %v90
    %v105 = vmul.f32 %v104, %v103
    %v106 = vmul.f32 0.5, %v105
    %v107 = vsub.f32 1.5, %v106
    %v108 = vmul.f32 %v103, %v107
    %v109 = vmul.f32 %v90, %v108
    %vm110 = vcmp.eq.f32.partialorder %v90, inf
    %v111 = vsel %vm110, %v90, %v109
    %vm112 = vcmp.eq.f32.partialorder %v90, 0.0
    %v113 = vand.u32 %v90, 2147483648
    %v114 = vsel %vm112, %v113, %v111
    %v115 = vadd.f32 %v102, 1e-06
    %v116 = vadd.f32 %v114, 1e-06
    %v117 = vrcp.pop %v115
    %v118 = vrcp.pop %v116
    %v119 = vmul.f32 %v72, %v117
    %v120 = vmul.f32 %v73, %v118
    %v121 = vld [vmem:[%s3] sm:$0x1]
    %v123 = vperm.slane %v121, 0
    %v125 = vmul.f32 %v119, %v123
    %v126 = vmul.f32 %v120, %v123
    %v127 = vld [vmem:[%s4] sm:$0x1]
    %v129 = vperm.slane %v127, 0
    %v131 = vadd.f32 %v125, %v129
    %v132 = vadd.f32 %v126, %v129
    %v133 = vpack.c.bf16 %v132, %v131
    %v134 = vld [vmem:[#allocation5] sm:$0xf]
    %v135 = vld [vmem:[#allocation5 + $0x4] sm:$0xf]
    %v136 = vld [vmem:[#allocation5 + $0x8] sm:$0xf]
    %v137 = vld [vmem:[#allocation5 + $0xc] sm:$0xf]
    %v138 = vld [vmem:[%s2] sm:$0x1]
    %v140 = vperm.slane %v138, 0
    %v146 = vunpack.c.l.b16 %v134
    %v147 = vunpack.c.l.b16 %v135
    %v148 = vunpack.c.l.b16 %v136
    %v149 = vunpack.c.l.b16 %v137
    %v150 = vpack.c.b16 %v147, %v146
    %v151 = vpack.c.b16 %v149, %v148
    %v155 = vsel %vm56, %v133, 0
    %157 = vmatpush.bf16.msra.mxu0 0
    %158 = vmatpush.bf16.msra.mxu0 0
    %159 = vmatpush.bf16.msra.mxu0 0
    %160 = vmatpush.bf16.msra.mxu0 0
    %161 = vmatpush.bf16.msra.mxu0 0
    %162 = vmatpush.bf16.msra.mxu0 0
    %163 = vmatpush.bf16.msra.mxu0 %v151
    %164 = vmatpush.bf16.msra.mxu0 %v150
    %165 = vmatmul.bf16.gmra.mxu0 %v155
    %v166 = vpop.f32.mrf.mxu0
    %v167 = vadd.f32 %v140, %v166
    %v168 = vpop.f32.mrf.mxu0
    %v169 = vadd.f32 %v140, %v168
    %170 = vdwg.mxu0
    %v171 = vadd.f32 %v54, %v167
    %v172 = vadd.f32 %v55, %v169
    %173 = vst.msk [vmem:[#allocation7] sm:$0xff] %vm56, %v171
    %174 = vst.msk [vmem:[#allocation7 + $0x8] sm:$0xff] %vm56, %v172
    // Predicated region
    $region30: #{tpu_custom_call.1} parent=1 // pred_check
      _
    $region31: #{tpu_custom_call.1} parent=1 // pred_check_branch
      %176 = sbr.rel (0) target = $region33
    $region32: #{tpu_custom_call.1} parent=1 // pred_region
      %178 = vsyncadd [#allocation4], 0
      %s179 = sshll.u32 [#allocation7], 4
      %s180 = int_to_ptr.vmem [resolvable:$true] %s179
      %s181 = sshll.u32 %s5, 4
      %s182 = int_to_ptr.hbm [resolvable:$true] %s181
      %187 = dma.vmem_to_hbm [thread:$0]  %s180, 256, %s182, [#allocation4], 128, 128, 8
    $region33: #{tpu_custom_call.1} parent=1 // pred_fallthru
      _
    // Predicated region
    $region34: #{tpu_custom_call.1} parent=1 // pred_check
      _
    $region35: #{tpu_custom_call.1} parent=1 // pred_check_branch
      %189 = sbr.rel (0) target = $region37
    $region36: #{tpu_custom_call.1} parent=1 // pred_region
      %191 = dma.done [#allocation4], 256
    $region37: #{tpu_custom_call.1} parent=1 // pred_fallthru
      _
    %192 = vsyncpa [#allocation3], 1
    %193 = vsyncpa [#allocation6], 1
    %194 = vsyncpa [#allocation4], 1

</llo_original>
